<compile_context>
chip_gen: v7x
topology: tpu7x:2x2x1
jax: 0.10.0
libtpu: 0.0.40
codegen_flags: <defaults>
</compile_context>

<pallas_src>
import functools

import numpy as np
import jax
import jax.numpy as jnp
from jax.experimental import pallas as pl
from jax.experimental.pallas import tpu as pltpu


def _cb_loss_kernel(yhat_ref, aux_ref, out_ref, *, class_axis):
    """One batch tile. class_axis=0 -> (N, TB) layout; class_axis=1 -> (TB, N)."""
    x = yhat_ref[...].astype(jnp.float32)      # logits tile
    if class_axis == 0:
        at = aux_ref[0:1, :]                   # (1, TB) per-sample weight w[y]
        xt = aux_ref[1:2, :]                   # (1, TB) target logit
    else:
        at = aux_ref[:, 0:1]                   # (TB, 1)
        xt = aux_ref[:, 1:2]                   # (TB, 1)

    # stable log-softmax pieces (one exp + one log per element row)
    m = jnp.max(x, axis=class_axis, keepdims=True)
    e = jnp.exp(x - m)
    s = jnp.sum(e, axis=class_axis, keepdims=True)
    log_s = jnp.log(s)

    # log(1 - p) = log(s - e) - log(s); torch BCE clamps log outputs at -100
    log1mp = jnp.maximum(jnp.log(s - e) - log_s, -100.0)
    sum_log1mp = jnp.sum(log1mp, axis=class_axis, keepdims=True)

    # target-class correction (per-sample scalars; exp(xt-m) is bit-identical to
    # the corresponding element of e, so the swap below cancels exactly)
    et = jnp.exp(xt - m)
    logp_t = jnp.maximum((xt - m) - log_s, -100.0)
    log1mp_t = jnp.maximum(jnp.log(s - et) - log_s, -100.0)

    partial = -jnp.sum(at * (sum_log1mp - log1mp_t + logp_t))
    out_ref[0, 0] = partial                    # single store per grid step


def _vmem_limit_bytes():
    """Scoped VMEM limit adapted to the chip (v5e/v6e: 64 MiB, v7x: 32 MiB)."""
    try:
        cap = int(pltpu.get_tpu_info().vmem_capacity_bytes)
    except Exception:
        cap = 64 << 20          # conservative (v7x-sized) fallback
    return min(100 << 20, max(32 << 20, cap // 2))


def _auto_batch_tile(n_eff, in_bytes, vmem_limit):
    """Batch rows per tile from a VMEM budget.

    Accounts for the 2x double-buffered input tile plus ~5 live (tile, N) f32
    intermediates in the kernel, with half the scoped limit kept as headroom.
    """
    per_row = n_eff * (2 * in_bytes + 5 * 4)
    rows = (vmem_limit // 2) // per_row
    # keep each y_hat input buffer in the 2-8 MiB sweet spot
    rows = min(rows, (6 << 20) // max(1, n_eff * in_bytes))
    return max(1, int(rows))


def class_balanced_loss(y_hat, y, samples_per_cls, beta=0.9999, tb=None):
    """y_hat: (B, N) float logits (any float dtype), y: (B,) int labels."""
    samples_per_cls = np.asarray(samples_per_cls, dtype=np.float64)
    num_classes = int(samples_per_cls.shape[0])
    effective_num = 1.0 - np.power(beta, samples_per_cls)
    weights = (1.0 - beta) / effective_num
    weights = weights / weights.sum() * num_classes      # sum == num_classes
    w = jnp.asarray(weights, dtype=jnp.float32)

    B, N = y_hat.shape
    assert N == num_classes

    # per-sample class-balanced weight and target logit (tiny XLA gathers)
    labels = y.astype(jnp.int32)
    at = jnp.take(w, labels, axis=0)                                    # (B,)
    xt = jnp.take_along_axis(y_hat, labels[:, None], axis=1)[:, 0]      # (B,)
    xt = xt.astype(jnp.float32)

    # layout: for small class counts put batch on the lane axis (class on sublane)
    transposed = N < 128
    align = 128 if transposed else 8
    n_eff = -(-N // 8) * 8 if transposed else -(-N // 128) * 128
    in_bytes = jnp.dtype(y_hat.dtype).itemsize
    vmem_limit = _vmem_limit_bytes()

    if tb is None:
        tb = _auto_batch_tile(n_eff, in_bytes, vmem_limit)
    tb = max(align, (int(tb) + align - 1) // align * align)
    b_aligned = (B + align - 1) // align * align
    tb = min(tb, b_aligned)
    grid = pl.cdiv(B, tb)
    b_padded = grid * tb
    pad = b_padded - B          # padded samples get weight 0 -> contribute 0

    if transposed:
        x_in = jnp.pad(y_hat.T, ((0, 0), (0, pad)))                     # (N, Bp)
        aux = jnp.pad(jnp.stack([at, xt], axis=0), ((0, 0), (0, pad)))  # (2, Bp)
        x_spec = pl.BlockSpec((N, tb), lambda i: (0, i))
        aux_spec = pl.BlockSpec((2, tb), lambda i: (0, i))
        class_axis = 0
    else:
        x_in = jnp.pad(y_hat, ((0, pad), (0, 0)))                       # (Bp, N)
        aux = jnp.pad(jnp.stack([at, xt], axis=1), ((0, pad), (0, 0)))  # (Bp, 2)
        x_spec = pl.BlockSpec((tb, N), lambda i: (i, 0))
        aux_spec = pl.BlockSpec((tb, 2), lambda i: (i, 0))
        class_axis = 1

    kernel = functools.partial(_cb_loss_kernel, class_axis=class_axis)

    partials = pl.pallas_call(
        kernel,
        out_shape=jax.ShapeDtypeStruct((grid, 1), jnp.float32),
        grid_spec=pltpu.PrefetchScalarGridSpec(
            num_scalar_prefetch=0,
            grid=(grid,),
            in_specs=[x_spec, aux_spec],
            out_specs=pl.BlockSpec((1, 1), lambda i: (i, 0),
                                   memory_space=pltpu.MemorySpace.SMEM),
        ),
        compiler_params=pltpu.CompilerParams(
            dimension_semantics=("parallel",),     # independent tiles (megacore)
            vmem_limit_bytes=vmem_limit,
        ),
    )(x_in, aux)

    # tiny tree-reduce + mean in XLA (avoids serial scalar accumulation)
    return jnp.sum(partials) / float(B * N)


def _reference(y_hat, y, samples_per_cls, beta=0.9999):
    # pure-JAX mirror of the torch math (for sanity checking)
    samples_per_cls = np.asarray(samples_per_cls, dtype=np.float64)
    num_classes = samples_per_cls.shape[0]
    effective_num = 1.0 - np.power(beta, samples_per_cls)
    weights = (1.0 - beta) / effective_num
    weights = weights / weights.sum() * num_classes
    w = jnp.asarray(weights, dtype=jnp.float32)

    one_hot = jax.nn.one_hot(y, num_classes, dtype=jnp.float32)
    at = jnp.sum(one_hot * w[None, :], axis=1, keepdims=True)
    p = jax.nn.softmax(y_hat.astype(jnp.float32), axis=1)
    logp = jnp.maximum(jnp.log(p), -100.0)
    log1mp = jnp.maximum(jnp.log(1.0 - p), -100.0)
    loss = -at * (one_hot * logp + (1.0 - one_hot) * log1mp)
    return jnp.mean(loss)


if __name__ == "__main__":
    key = jax.random.PRNGKey(0)
    k = jax.random.split(key, 6)

    # case 1: tiny small-N problem (class-on-sublane layout), single tile
    spc1 = [50, 30, 15, 5]
    B1, N1 = 8, 4
    yh1 = jax.random.normal(k[0], (B1, N1), dtype=jnp.float32)
    y1 = jax.random.randint(k[1], (B1,), 0, N1, dtype=jnp.int32)
    l1 = jax.block_until_ready(class_balanced_loss(yh1, y1, spc1, beta=0.9999))
    r1 = _reference(yh1, y1, spc1, beta=0.9999)
    assert np.allclose(np.asarray(l1), np.asarray(r1), rtol=1e-5, atol=1e-5), (l1, r1)

    # case 2: small-N layout, multi-tile grid + ragged batch padding
    spc2 = [100, 60, 35, 20, 12, 8, 5, 2]
    B2, N2 = 200, 8
    yh2 = jax.random.normal(k[2], (B2, N2), dtype=jnp.float32)
    y2 = jax.random.randint(k[3], (B2,), 0, N2, dtype=jnp.int32)
    l2 = jax.block_until_ready(class_balanced_loss(yh2, y2, spc2, beta=0.9999, tb=128))
    r2 = _reference(yh2, y2, spc2, beta=0.9999)
    assert np.allclose(np.asarray(l2), np.asarray(r2), rtol=1e-5, atol=1e-5), (l2, r2)

    # case 3: large-N path ((batch, class) layout), multi-tile + ragged padding
    spc3 = (np.arange(256) % 37 + 3).tolist()
    B3, N3 = 37, 256
    yh3 = jax.random.normal(k[4], (B3, N3), dtype=jnp.float32)
    y3 = jax.random.randint(k[5], (B3,), 0, N3, dtype=jnp.int32)
    l3 = jax.block_until_ready(class_balanced_loss(yh3, y3, spc3, beta=0.9999, tb=16))
    r3 = _reference(yh3, y3, spc3, beta=0.9999)
    assert np.allclose(np.asarray(l3), np.asarray(r3), rtol=1e-5, atol=1e-5), (l3, r3)

    print("KERNEL_OK")
</pallas_src>

<mosaic_0001>
module attributes {stable_mosaic.version = 11 : i64} {
  func.func @_cb_loss_kernel(%arg0: i32, %arg1: memref<4x128xf32, #tpu.memory_space<vmem>>, %arg2: memref<2x128xf32, #tpu.memory_space<vmem>>, %arg3: memref<1x1xf32, #tpu.memory_space<smem>>) attributes {dimension_semantics = [#tpu.dimension_semantics<parallel>], iteration_bounds = array<i64: 1>, scalar_prefetch = 0 : i64, scratch_operands = 0 : i64, tpu.core_type = #tpu.core_type<tc>, window_params = [{transform_indices = @transform_0, window_bounds = array<i64: 4, 128>}, {transform_indices = @transform_1, window_bounds = array<i64: 2, 128>}, {transform_indices = @transform_2, window_bounds = array<i64: 1, 1>}]} {
    %c0 = arith.constant 0 : index
    %c0_0 = arith.constant 0 : index
    %0 = vector.load %arg1[%c0, %c0_0] : memref<4x128xf32, #tpu.memory_space<vmem>>, vector<4x128xf32>
    %c0_1 = arith.constant 0 : index
    %c0_2 = arith.constant 0 : index
    %1 = vector.load %arg2[%c0_1, %c0_2] : memref<2x128xf32, #tpu.memory_space<vmem>>, vector<1x128xf32>
    %c1 = arith.constant 1 : index
    %c0_3 = arith.constant 0 : index
    %2 = vector.load %arg2[%c1, %c0_3] : memref<2x128xf32, #tpu.memory_space<vmem>>, vector<1x128xf32>
    %cst = arith.constant dense<0xFF800000> : vector<128xf32>
    %3 = vector.multi_reduction <maximumf>, %0, %cst [0] : vector<4x128xf32> to vector<128xf32>
    %4 = vector.shape_cast %3 : vector<128xf32> to vector<1x128xf32>
    %5 = vector.broadcast %4 : vector<1x128xf32> to vector<4x128xf32>
    %6 = arith.subf %0, %5 : vector<4x128xf32>
    %7 = math.exp %6 : vector<4x128xf32>
    %cst_4 = arith.constant dense<0.000000e+00> : vector<128xf32>
    %8 = vector.multi_reduction <add>, %7, %cst_4 [0] : vector<4x128xf32> to vector<128xf32>
    %9 = vector.shape_cast %8 : vector<128xf32> to vector<1x128xf32>
    %10 = math.log %9 : vector<1x128xf32>
    %11 = vector.broadcast %9 : vector<1x128xf32> to vector<4x128xf32>
    %12 = arith.subf %11, %7 : vector<4x128xf32>
    %13 = math.log %12 : vector<4x128xf32>
    %14 = vector.broadcast %10 : vector<1x128xf32> to vector<4x128xf32>
    %15 = arith.subf %13, %14 : vector<4x128xf32>
    %cst_5 = arith.constant -1.000000e+02 : f32
    %16 = vector.broadcast %cst_5 : f32 to vector<4x128xf32>
    %17 = arith.maximumf %15, %16 : vector<4x128xf32>
    %cst_6 = arith.constant dense<0.000000e+00> : vector<128xf32>
    %18 = vector.multi_reduction <add>, %17, %cst_6 [0] : vector<4x128xf32> to vector<128xf32>
    %19 = vector.shape_cast %18 : vector<128xf32> to vector<1x128xf32>
    %20 = arith.subf %2, %4 : vector<1x128xf32>
    %21 = math.exp %20 : vector<1x128xf32>
    %22 = arith.subf %2, %4 : vector<1x128xf32>
    %23 = arith.subf %22, %10 : vector<1x128xf32>
    %cst_7 = arith.constant -1.000000e+02 : f32
    %24 = vector.broadcast %cst_7 : f32 to vector<1x128xf32>
    %25 = arith.maximumf %23, %24 : vector<1x128xf32>
    %26 = arith.subf %9, %21 : vector<1x128xf32>
    %27 = math.log %26 : vector<1x128xf32>
    %28 = arith.subf %27, %10 : vector<1x128xf32>
    %cst_8 = arith.constant -1.000000e+02 : f32
    %29 = vector.broadcast %cst_8 : f32 to vector<1x128xf32>
    %30 = arith.maximumf %28, %29 : vector<1x128xf32>
    %31 = arith.subf %19, %30 : vector<1x128xf32>
    %32 = arith.addf %31, %25 : vector<1x128xf32>
    %33 = arith.mulf %1, %32 : vector<1x128xf32>
    %34 = vector.shape_cast %33 : vector<1x128xf32> to vector<1x1x128xf32>
    %cst_9 = arith.constant dense<0.000000e+00> : vector<1xf32>
    %35 = vector.multi_reduction <add>, %34, %cst_9 [1, 2] : vector<1x1x128xf32> to vector<1xf32>
    %36 = vector.shape_cast %35 : vector<1xf32> to vector<1x1x1xf32>
    %37 = vector.extract %36[0, 0, 0] : f32 from vector<1x1x1xf32>
    %cst_10 = arith.constant 0.000000e+00 : f32
    %38 = arith.subf %cst_10, %37 : f32
    %c0_11 = arith.constant 0 : index
    %c0_12 = arith.constant 0 : index
    %39 = memref.load %arg3[%c0_11, %c0_12] : memref<1x1xf32, #tpu.memory_space<smem>>
    memref.store %38, %arg3[%c0_11, %c0_12] : memref<1x1xf32, #tpu.memory_space<smem>>
    return
  }
  func.func @transform_0(%arg0: i32) -> (i32, i32) {
    %c0_i32 = arith.constant 0 : i32
    %c0_i32_0 = arith.constant 0 : i32
    return %c0_i32, %arg0 : i32, i32
  }
  func.func @transform_1(%arg0: i32) -> (i32, i32) {
    %c0_i32 = arith.constant 0 : i32
    %c0_i32_0 = arith.constant 0 : i32
    return %c0_i32, %arg0 : i32, i32
  }
  func.func @transform_2(%arg0: i32) -> (i32, i32) {
    %c0_i32 = arith.constant 0 : i32
    %c0_i32_0 = arith.constant 0 : i32
    return %arg0, %c0_i32 : i32, i32
  }
}

</mosaic_0001>

<llo_original>
// kernel: tpu_custom_call.1
$region0: #{tpu_custom_call.1}
  #allocation0 [shape = 'u32[]', space=smem, size = 0x4, offset = 0x4, fixed_abs, tag = 'smem constant byte address 0x4 - core index']
  #allocation1 [shape = 'u32[144,128]{1,0:T(1,128)}', space=vmem, size = 0x12000, scoped, tag = 'internal scratch']
  %s0 = inlined_call_operand.hbm [shape: f32[4,128], index: 0, kind: input, shape index: {}]
  %s1 = inlined_call_operand.vmem [shape: f32[2,128], index: 1, kind: input, shape index: {}]
  %s2 = inlined_call_operand.hbm [shape: f32[1,1], index: 2, kind: output, shape index: {}]
  %s3 = sld [smem:[#allocation0]]
  $region22: #{tpu_custom_call.1} parent=0
    _
  %s5 = ssub.s32 1, %s3
  %s6 = scalar_select 0, %s5, %s3
  $region1: #{tpu_custom_call.1} parent=0
    #allocation2 [shape = 'u8[2048]{0}', space=vmem, size = 0x800, scoped, tag = 'input window, operand 0, single buffered']
    #allocation3 [shape = 's32[1]{0}', space=sflag, size = 0x4, scoped, tag = 'scoped memory for tpu_custom_call.1']
    #allocation4 [shape = 's32[1]{0}', space=sflag, size = 0x4, scoped, tag = 'scoped memory for tpu_custom_call.1']
    #allocation5 [shape = 'u8[512]{0}', space=smem, size = 0x200, scoped, tag = 'output window, operand 0, single buffered']
    %7 = vsyncpa [#allocation3], 0
    %8 = vsyncpa [#allocation4], 0
    // Predicated region
    $region2: #{tpu_custom_call.1} parent=1 // pred_check
      _
    $region3: #{tpu_custom_call.1} parent=1 // pred_check_branch
      %10 = sbr.rel (0) target = $region5
    $region4: #{tpu_custom_call.1} parent=1 // pred_region
      %s12 = ssub.s32 64, 64
      %13 = vsyncadd [#allocation3], %s12
      %s15 = sshll.u32 [#allocation2], 4
      %s16 = int_to_ptr.vmem [resolvable:$true] %s15
      %18 = dma.hbm_to_vmem [thread:$0]  %s0, 64, %s16, [#allocation3]
    $region5: #{tpu_custom_call.1} parent=1 // pred_fallthru
      _
    // Predicated region
    $region6: #{tpu_custom_call.1} parent=1 // pred_check
      _
    $region7: #{tpu_custom_call.1} parent=1 // pred_check_branch
      %20 = sbr.rel (0) target = $region9
    $region8: #{tpu_custom_call.1} parent=1 // pred_region
      _
    $region9: #{tpu_custom_call.1} parent=1 // pred_fallthru
      _
    // Predicated region
    $region10: #{tpu_custom_call.1} parent=1 // pred_check
      _
    $region11: #{tpu_custom_call.1} parent=1 // pred_check_branch
      %22 = sbr.rel (0) target = $region13
    $region12: #{tpu_custom_call.1} parent=1 // pred_region
      %23 = dma.done [#allocation3], 64
    $region13: #{tpu_custom_call.1} parent=1 // pred_fallthru
      _
    %v24 = vld [vmem:[#allocation2] sm:$0xf]
    %v25 = vld [vmem:[%s1] sm:$0x1]
    %v26 = vld [vmem:[%s1 + $0x1] sm:$0x1]
    %vm27 = vcmask 1043456
    %v28 = vsel %vm27, %v24, -inf
    %v29 = vrot.slane %v28, 4
    %v30 = vmax.f32 %v28, %v29
    %v31 = vrot.slane %v30, 2
    %v32 = vmax.f32 %v30, %v31
    %v33 = vrot.slane %v32, 1
    %v34 = vmax.f32 %v32, %v33
    %v35 = vsub.f32 %v24, %v34
    %v36 = vmul.f32 %v35, 1.442695
    %v37 = vpow.pop %v36
    %v38 = vsel %vm27, %v37, 0.0
    %v39 = vrot.slane %v38, 4
    %v40 = vadd.f32 %v38, %v39
    %v41 = vrot.slane %v40, 2
    %v42 = vadd.f32 %v40, %v41
    %v43 = vrot.slane %v42, 1
    %v44 = vadd.f32 %v42, %v43
    %v45 = vlog2.pop %v44
    %v46 = vmul.f32 %v45, 0.6931472
    %v47 = vsub.f32 %v44, %v37
    %v48 = vlog2.pop %v47
    %v49 = vmul.f32 %v48, 0.6931472
    %v50 = vsub.f32 %v49, %v46
    %v51 = vmax.f32 %v50, -100.0
    %v52 = vsel %vm27, %v51, 0.0
    %v53 = vrot.slane %v52, 4
    %v54 = vadd.f32 %v52, %v53
    %v55 = vrot.slane %v54, 2
    %v56 = vadd.f32 %v54, %v55
    %v57 = vrot.slane %v56, 1
    %v58 = vadd.f32 %v56, %v57
    %v59 = vsub.f32 %v26, %v34
    %v60 = vmul.f32 %v59, 1.442695
    %v61 = vpow.pop %v60
    %v62 = vsub.f32 %v59, %v46
    %v63 = vmax.f32 %v62, -100.0
    %v64 = vsub.f32 %v44, %v61
    %v65 = vlog2.pop %v64
    %v66 = vmul.f32 %v65, 0.6931472
    %v67 = vsub.f32 %v66, %v46
    %v68 = vmax.f32 %v67, -100.0
    %v69 = vsub.f32 %v58, %v68
    %v70 = vadd.f32 %v69, %v63
    %v71 = vmul.f32 %v25, %v70
    %vm72 = vcmask 1040384
    %v73 = vsel %vm72, %v71, 0.0
    %74 = vadd.xlane.f32.xlu0 %v73
    %v75 = vpop.xlane.xlu0 %74
    %v76 = vrot.slane %v75, 4
    %v77 = vadd.f32 %v75, %v76
    %v78 = vrot.slane %v77, 2
    %v79 = vadd.f32 %v77, %v78
    %v80 = vrot.slane %v79, 1
    %v81 = vadd.f32 %v79, %v80
    %s82 = vtos %v81
    %s83 = ssub.f32 0.0, %s82
    %s84 = scalar_lea.smem [#allocation5], 0
    %85 = sst [smem:[%s84]] %s83
    // Predicated region
    $region14: #{tpu_custom_call.1} parent=1 // pred_check
      _
    $region15: #{tpu_custom_call.1} parent=1 // pred_check_branch
      %87 = sbr.rel (0) target = $region17
    $region16: #{tpu_custom_call.1} parent=1 // pred_region
      %s89 = ssub.s32 16, 16
      %90 = vsyncadd [#allocation4], %s89
      %93 = dma.smem_to_hbm [#allocation5], 16, %s2, [#allocation4]
    $region17: #{tpu_custom_call.1} parent=1 // pred_fallthru
      _
    // Predicated region
    $region18: #{tpu_custom_call.1} parent=1 // pred_check
      _
    $region19: #{tpu_custom_call.1} parent=1 // pred_check_branch
      %95 = sbr.rel (0) target = $region21
    $region20: #{tpu_custom_call.1} parent=1 // pred_region
      %96 = dma.done [#allocation4], 16
    $region21: #{tpu_custom_call.1} parent=1 // pred_fallthru
      _
    %97 = sfence
    %98 = vsyncpa [#allocation3], 1
    %99 = vsyncpa [#allocation4], 1

</llo_original>
